<compile_context>
chip_gen: v6e
topology: v6e:2x2x1
jax: 0.10.0
libtpu: 0.0.40
codegen_flags: <defaults>
</compile_context>

<pallas_src>
import functools
import math

import numpy as np
import jax
import jax.numpy as jnp
from jax.experimental import pallas as pl
from jax.experimental.pallas import tpu as pltpu

EPS = 1e-12
LANES = 128
SUBLANES = 8
MAX_FOLD_WIDTH = 512            # cap folded lane width (segment matrix <= 1 MiB)
BLOCK_BYTES = 2 * 1024 * 1024   # ~2 MiB per block, counted in f32 (covers temps)


def _norm_kernel_plain(x_ref, o_ref):
    """Block = (tile_rows, D); normalize each row over the full last axis."""
    x = x_ref[...].astype(jnp.float32)
    variance = jnp.mean(x * x, axis=-1, keepdims=True)
    inv = jax.lax.rsqrt(variance + EPS)            # EUP rsqrt, then VPU mul
    o_ref[...] = (x * inv).astype(o_ref.dtype)


def _norm_kernel_folded(x_ref, s_ref, o_ref, *, inv_d):
    """Lane-dense block = (tile_rows, W); each W-lane row packs W//d
    independent length-d rows.  One MXU matmul against the constant
    block-diagonal 0/1 segment matrix S broadcasts every segment's
    sum-of-squares to all of its lanes (replaces the per-group masked
    XLU-reduction / where-chain).  x^2 accumulation stays f32 (HIGHEST)."""
    x = x_ref[...].astype(jnp.float32)
    x2 = x * x
    seg_sums = jnp.dot(x2, s_ref[...],
                       preferred_element_type=jnp.float32,
                       precision=jax.lax.Precision.HIGHEST)
    inv = jax.lax.rsqrt(seg_sums * inv_d + EPS)
    o_ref[...] = (x * inv).astype(o_ref.dtype)


def _round_up(x, m):
    return (x + m - 1) // m * m


def _sublane_multiple(dtype):
    # sub-32-bit dtypes pack along sublanes: 8 (f32) / 16 (bf16) / 32 (int8/fp8)
    itemsize = jnp.dtype(dtype).itemsize
    return SUBLANES * max(1, 4 // itemsize)


def norm(x: jax.Array) -> jax.Array:
    """x / sqrt(mean(x*x, axis=-1, keepdims=True) + eps)."""
    orig_shape = x.shape
    d = orig_shape[-1]
    rows = math.prod(orig_shape[:-1]) if len(orig_shape) > 1 else 1
    itemsize = jnp.dtype(x.dtype).itemsize
    sub = _sublane_multiple(x.dtype)

    # ---- Lane-dense folding for narrow D (generalized to 128 % D != 0) ----
    fold = False
    width = d
    if d < LANES:
        w = math.lcm(d, LANES)
        if w <= MAX_FOLD_WIDTH and (rows * d) % w == 0:
            fold = True
            width = w

    if fold:
        n_rows = (rows * d) // width
        x2d = x.reshape(n_rows, width)             # pure row-major reshape
        seg = np.arange(width) // d
        seg_mat = jnp.asarray((seg[:, None] == seg[None, :]).astype(np.float32))
        kernel = functools.partial(_norm_kernel_folded, inv_d=1.0 / d)
    else:
        n_rows = rows
        x2d = x.reshape(n_rows, d)
        kernel = _norm_kernel_plain

    # ---- Tile sizing: ~2 MiB blocks, >=2 grid steps when rows permit ------
    tile_rows = max(sub, (BLOCK_BYTES // (width * 4)) // sub * sub)
    if n_rows > sub:                               # let v7x shard rows over 2 TCs
        tile_rows = min(tile_rows, _round_up(-(-n_rows // 2), sub))
    tile_rows = min(tile_rows, _round_up(n_rows, sub))
    tile_rows = max(tile_rows, sub)

    grid = (pl.cdiv(n_rows, tile_rows),)           # no host-side padding copies

    cost = pl.CostEstimate(
        flops=3 * rows * d + (2 * n_rows * width * width if fold else 0),
        transcendentals=rows,                      # one rsqrt per row
        bytes_accessed=2 * rows * d * itemsize,    # read x + write y
    )

    in_specs = [pl.BlockSpec((tile_rows, width), lambda i: (i, 0))]
    args = (x2d,)
    if fold:
        # Constant segment matrix: same block every step -> resident in VMEM.
        in_specs.append(pl.BlockSpec((width, width), lambda i: (0, 0)))
        args = (x2d, seg_mat)

    out = pl.pallas_call(
        kernel,
        out_shape=jax.ShapeDtypeStruct((n_rows, width), x.dtype),
        grid_spec=pltpu.PrefetchScalarGridSpec(
            num_scalar_prefetch=0,
            grid=grid,
            in_specs=in_specs,
            out_specs=pl.BlockSpec((tile_rows, width), lambda i: (i, 0)),
        ),
        compiler_params=pltpu.CompilerParams(
            dimension_semantics=("parallel",),     # megacore row sharding (v7x)
            vmem_limit_bytes=32 * 1024 * 1024,     # safe on v7x's 64 MiB VMEM
        ),
        cost_estimate=cost,
    )(*args)

    return out.reshape(orig_shape)


def _norm_ref(x):
    variance = jnp.mean(x * x, axis=-1, keepdims=True)
    return x / jnp.sqrt(variance + EPS)


if __name__ == "__main__":
    key = jax.random.PRNGKey(0)

    # Shapes consistent with the GAU usage (batch, seq, hidden).
    test_shapes = [
        (2, 8, 32),    # D < 128, 128 % D == 0 -> folded path (W=128)
        (2, 8, 128),   # D == 128              -> plain lane-dense, 2 grid steps
        (2, 8, 48),    # D < 128, 128 % D != 0 -> generalized fold (W=384)
    ]

    ok = True
    for i, shape in enumerate(test_shapes):
        k = jax.random.fold_in(key, i)
        x = jax.random.normal(k, shape, dtype=jnp.float32)

        y = norm(x)
        jax.block_until_ready(y)

        y_ref = _norm_ref(x)
        ok &= (y.shape == x.shape) and (y.dtype == x.dtype)
        ok &= bool(jnp.allclose(y, y_ref, atol=1e-5, rtol=1e-5))

    assert ok
    print("KERNEL_OK")
</pallas_src>

<mosaic_0001>
module attributes {stable_mosaic.version = 11 : i64} {
  func.func @_norm_kernel_folded(%arg0: i32, %arg1: memref<8x128xf32, #tpu.memory_space<vmem>>, %arg2: memref<128x128xf32, #tpu.memory_space<vmem>>, %arg3: memref<8x128xf32, #tpu.memory_space<vmem>>) attributes {dimension_semantics = [#tpu.dimension_semantics<parallel>], iteration_bounds = array<i64: 1>, scalar_prefetch = 0 : i64, scratch_operands = 0 : i64, tpu.core_type = #tpu.core_type<tc>, window_params = [{transform_indices = @transform_0, window_bounds = array<i64: 8, 128>}, {pipeline_mode = #tpu.pipeline_mode<synchronous>, transform_indices = @transform_1, window_bounds = array<i64: 128, 128>}, {transform_indices = @transform_2, window_bounds = array<i64: 8, 128>}]} {
    %c0 = arith.constant 0 : index
    %c0_0 = arith.constant 0 : index
    %0 = vector.load %arg1[%c0, %c0_0] : memref<8x128xf32, #tpu.memory_space<vmem>>, vector<8x128xf32>
    %1 = arith.mulf %0, %0 : vector<8x128xf32>
    %c0_1 = arith.constant 0 : index
    %c0_2 = arith.constant 0 : index
    %2 = vector.load %arg2[%c0_1, %c0_2] : memref<128x128xf32, #tpu.memory_space<vmem>>, vector<128x128xf32>
    %cst = arith.constant dense<0.000000e+00> : vector<8x128xf32>
    %3 = tpu.matmul %1, %2, %cst {dimension_numbers = #tpu.dot_dimension_numbers<[1], [0], [0], [1], [0, 0, 1, 1], [], []>, precision = #tpu.contract_precision<fp32>} : vector<8x128xf32>, vector<128x128xf32>, vector<8x128xf32> -> vector<8x128xf32>
    %cst_3 = arith.constant 3.125000e-02 : f32
    %4 = vector.broadcast %cst_3 : f32 to vector<8x128xf32>
    %5 = arith.mulf %3, %4 : vector<8x128xf32>
    %cst_4 = arith.constant 9.99999996E-13 : f32
    %6 = vector.broadcast %cst_4 : f32 to vector<8x128xf32>
    %7 = arith.addf %5, %6 : vector<8x128xf32>
    %8 = math.rsqrt %7 : vector<8x128xf32>
    %9 = arith.mulf %0, %8 : vector<8x128xf32>
    %c0_5 = arith.constant 0 : index
    %c0_6 = arith.constant 0 : index
    %10 = vector.load %arg3[%c0_5, %c0_6] : memref<8x128xf32, #tpu.memory_space<vmem>>, vector<8x128xf32>
    tpu.vector_store %arg3[%c0_5, %c0_6], %9 {strides = array<i32>} : memref<8x128xf32, #tpu.memory_space<vmem>>, vector<8x128xf32>,
    return
  }
  func.func @transform_0(%arg0: i32) -> (i32, i32) {
    %c0_i32 = arith.constant 0 : i32
    %c0_i32_0 = arith.constant 0 : i32
    return %arg0, %c0_i32 : i32, i32
  }
  func.func @transform_1(%arg0: i32) -> (i32, i32) {
    %c0_i32 = arith.constant 0 : i32
    %c0_i32_0 = arith.constant 0 : i32
    %c0_i32_1 = arith.constant 0 : i32
    return %c0_i32, %c0_i32_0 : i32, i32
  }
  func.func @transform_2(%arg0: i32) -> (i32, i32) {
    %c0_i32 = arith.constant 0 : i32
    %c0_i32_0 = arith.constant 0 : i32
    return %arg0, %c0_i32 : i32, i32
  }
}

</mosaic_0001>

<llo_original>
// kernel: tpu_custom_call.1
$region0: #{tpu_custom_call.1}
  #allocation0 [shape = 'u32[]', space=smem, size = 0x4, offset = 0x4, fixed_abs, tag = 'smem constant byte address 0x4 - core index']
  #allocation1 [shape = 'u32[144,128]{1,0:T(1,128)}', space=vmem, size = 0x12000, scoped, tag = 'internal scratch']
  %s0 = inlined_call_operand.hbm [shape: f32[4,128], index: 0, kind: input, shape index: {}]
  %s1 = inlined_call_operand.hbm [shape: f32[128,128], index: 1, kind: input, shape index: {}]
  %s2 = inlined_call_operand.hbm [shape: f32[4,128], index: 2, kind: output, shape index: {}]
  %s3 = sld [smem:[#allocation0]]
  $region26: #{tpu_custom_call.1} parent=0
    _
  %s5 = ssub.s32 1, %s3
  %s6 = scalar_select 0, %s5, %s3
  $region1: #{tpu_custom_call.1} parent=0
    #allocation2 [shape = 'u8[4096]{0}', space=vmem, size = 0x1000, scoped, tag = 'input window, operand 0, single buffered']
    #allocation3 [shape = 's32[1]{0}', space=sflag, size = 0x4, scoped, tag = 'scoped memory for tpu_custom_call.1']
    #allocation4 [shape = 's32[1]{0}', space=sflag, size = 0x4, scoped, tag = 'scoped memory for tpu_custom_call.1']
    #allocation5 [shape = 'u8[65536]{0}', space=vmem, size = 0x10000, scoped, tag = 'input window, operand 1, single buffered']
    #allocation6 [shape = 's32[1]{0}', space=sflag, size = 0x4, scoped, tag = 'scoped memory for tpu_custom_call.1']
    #allocation7 [shape = 'u8[4096]{0}', space=vmem, size = 0x1000, scoped, tag = 'output window, operand 0, single buffered']
    %7 = vsyncpa [#allocation3], 0
    %8 = vsyncpa [#allocation6], 0
    %9 = vsyncpa [#allocation4], 0
    // Predicated region
    $region2: #{tpu_custom_call.1} parent=1 // pred_check
      _
    $region3: #{tpu_custom_call.1} parent=1 // pred_check_branch
      %11 = sbr.rel (0) target = $region5
    $region4: #{tpu_custom_call.1} parent=1 // pred_region
      %s13 = ssub.s32 128, 64
      %14 = vsyncadd [#allocation3], %s13
      %s15 = sshll.u32 [#allocation2], 4
      %s16 = int_to_ptr.vmem [resolvable:$true] %s15
      %21 = dma.hbm_to_vmem [thread:$0]  %s0, 64, %s16, [#allocation3], 64, 64, 4
    $region5: #{tpu_custom_call.1} parent=1 // pred_fallthru
      _
    // Predicated region
    $region6: #{tpu_custom_call.1} parent=1 // pred_check
      _
    $region7: #{tpu_custom_call.1} parent=1 // pred_check_branch
      %23 = sbr.rel (0) target = $region9
    $region8: #{tpu_custom_call.1} parent=1 // pred_region
      %s25 = ssub.s32 2048, 2048
      %26 = vsyncadd [#allocation6], %s25
      %s27 = sshll.u32 [#allocation5], 4
      %s28 = int_to_ptr.vmem [resolvable:$true] %s27
      %33 = dma.hbm_to_vmem [thread:$0]  %s1, 2048, %s28, [#allocation6], 128, 128, 8
    $region9: #{tpu_custom_call.1} parent=1 // pred_fallthru
      _
    // Predicated region
    $region10: #{tpu_custom_call.1} parent=1 // pred_check
      _
    $region11: #{tpu_custom_call.1} parent=1 // pred_check_branch
      %35 = sbr.rel (0) target = $region13
    $region12: #{tpu_custom_call.1} parent=1 // pred_region
      %36 = dma.done [#allocation3], 128
    $region13: #{tpu_custom_call.1} parent=1 // pred_fallthru
      _
    // Predicated region
    $region14: #{tpu_custom_call.1} parent=1 // pred_check
      _
    $region15: #{tpu_custom_call.1} parent=1 // pred_check_branch
      %38 = sbr.rel (0) target = $region17
    $region16: #{tpu_custom_call.1} parent=1 // pred_region
      %39 = dma.done [#allocation6], 2048
    $region17: #{tpu_custom_call.1} parent=1 // pred_fallthru
      _
    %v40 = vld [vmem:[#allocation2] sm:$0xff]
    %v41 = vmul.f32 %v40, %v40
    %v42 = vld [vmem:[#allocation5] sm:$0xff]
    %v43 = vld [vmem:[#allocation5 + $0x8] sm:$0xff]
    %v44 = vld [vmem:[#allocation5 + $0x10] sm:$0xff]
    %v45 = vld [vmem:[#allocation5 + $0x18] sm:$0xff]
    %v46 = vld [vmem:[#allocation5 + $0x20] sm:$0xff]
    %v47 = vld [vmem:[#allocation5 + $0x28] sm:$0xff]
    %v48 = vld [vmem:[#allocation5 + $0x30] sm:$0xff]
    %v49 = vld [vmem:[#allocation5 + $0x38] sm:$0xff]
    %v50 = vld [vmem:[#allocation5 + $0x40] sm:$0xff]
    %v51 = vld [vmem:[#allocation5 + $0x48] sm:$0xff]
    %v52 = vld [vmem:[#allocation5 + $0x50] sm:$0xff]
    %v53 = vld [vmem:[#allocation5 + $0x58] sm:$0xff]
    %v54 = vld [vmem:[#allocation5 + $0x60] sm:$0xff]
    %v55 = vld [vmem:[#allocation5 + $0x68] sm:$0xff]
    %v56 = vld [vmem:[#allocation5 + $0x70] sm:$0xff]
    %v57 = vld [vmem:[#allocation5 + $0x78] sm:$0xff]
    %58 = vmatprep.subr.mxu0 0.0
    %v59 = vand.u32 %v57, 4294901760
    %60 = vmatpush1.msra.mxu0 %v59
    %61 = vmatprep.subr.mxu0 0.0
    %v62 = vand.u32 %v56, 4294901760
    %63 = vmatpush1.msra.mxu0 %v62
    %64 = vmatprep.subr.mxu0 0.0
    %v65 = vand.u32 %v55, 4294901760
    %66 = vmatpush1.msra.mxu0 %v65
    %67 = vmatprep.subr.mxu0 0.0
    %v68 = vand.u32 %v54, 4294901760
    %69 = vmatpush1.msra.mxu0 %v68
    %70 = vmatprep.subr.mxu0 0.0
    %v71 = vand.u32 %v53, 4294901760
    %72 = vmatpush1.msra.mxu0 %v71
    %73 = vmatprep.subr.mxu0 0.0
    %v74 = vand.u32 %v52, 4294901760
    %75 = vmatpush1.msra.mxu0 %v74
    %76 = vmatprep.subr.mxu0 0.0
    %v77 = vand.u32 %v51, 4294901760
    %78 = vmatpush1.msra.mxu0 %v77
    %79 = vmatprep.subr.mxu0 0.0
    %v80 = vand.u32 %v50, 4294901760
    %81 = vmatpush1.msra.mxu0 %v80
    %82 = vmatprep.subr.mxu0 0.0
    %v83 = vand.u32 %v49, 4294901760
    %84 = vmatpush1.msra.mxu0 %v83
    %85 = vmatprep.subr.mxu0 0.0
    %v86 = vand.u32 %v48, 4294901760
    %87 = vmatpush1.msra.mxu0 %v86
    %88 = vmatprep.subr.mxu0 0.0
    %v89 = vand.u32 %v47, 4294901760
    %90 = vmatpush1.msra.mxu0 %v89
    %91 = vmatprep.subr.mxu0 0.0
    %v92 = vand.u32 %v46, 4294901760
    %93 = vmatpush1.msra.mxu0 %v92
    %94 = vmatprep.subr.mxu0 0.0
    %v95 = vand.u32 %v45, 4294901760
    %96 = vmatpush1.msra.mxu0 %v95
    %97 = vmatprep.subr.mxu0 0.0
    %v98 = vand.u32 %v44, 4294901760
    %99 = vmatpush1.msra.mxu0 %v98
    %100 = vmatprep.subr.mxu0 0.0
    %v101 = vand.u32 %v43, 4294901760
    %102 = vmatpush1.msra.mxu0 %v101
    %103 = vmatprep.subr.mxu0 0.0
    %v104 = vand.u32 %v42, 4294901760
    %105 = vmatpush1.msra.mxu0 %v104
    %106 = vmatprep.subr.mxu0 0.0
    %107 = vmatpush2.msra.mxu0 0.0
    %108 = vmatprep.subr.mxu0 0.0
    %109 = vmatpush2.msra.mxu0 0.0
    %110 = vmatprep.subr.mxu0 0.0
    %111 = vmatpush2.msra.mxu0 0.0
    %112 = vmatprep.subr.mxu0 0.0
    %113 = vmatpush2.msra.mxu0 0.0
    %114 = vmatprep.subr.mxu0 0.0
    %115 = vmatpush2.msra.mxu0 0.0
    %116 = vmatprep.subr.mxu0 0.0
    %117 = vmatpush2.msra.mxu0 0.0
    %118 = vmatprep.subr.mxu0 0.0
    %119 = vmatpush2.msra.mxu0 0.0
    %120 = vmatprep.subr.mxu0 0.0
    %121 = vmatpush2.msra.mxu0 0.0
    %122 = vmatprep.subr.mxu0 0.0
    %123 = vmatpush2.msra.mxu0 0.0
    %124 = vmatprep.subr.mxu0 0.0
    %125 = vmatpush2.msra.mxu0 0.0
    %126 = vmatprep.subr.mxu0 0.0
    %127 = vmatpush2.msra.mxu0 0.0
    %128 = vmatprep.subr.mxu0 0.0
    %129 = vmatpush2.msra.mxu0 0.0
    %130 = vmatprep.subr.mxu0 0.0
    %131 = vmatpush2.msra.mxu0 0.0
    %132 = vmatprep.subr.mxu0 0.0
    %133 = vmatpush2.msra.mxu0 0.0
    %134 = vmatprep.subr.mxu0 0.0
    %135 = vmatpush2.msra.mxu0 0.0
    %136 = vmatprep.subr.mxu0 0.0
    %137 = vmatpush2.msra.mxu0 0.0
    %138 = vmatprep.mubr.f32.mxu0 0.0
    %v139 = vand.u32 %v41, 4294901760
    %v140 = vsub.f32 %v41, %v139
    %v141 = vand.u32 %v140, 4294901760
    %v142 = vsub.f32 %v140, %v141
    %v143 = vand.u32 %v142, 4294901760
    %144 = vmatmul.mubr.f32.gmra.mxu0 %v143
    %v145 = vpop.f32.mrf.mxu0
    %v146 = vadd.f32 0.0, %v145
    %v147 = vpop.f32.mrf.mxu0
    %148 = vdwg.mxu0
    %149 = vmatprep.subr.mxu0 0.0
    %v150 = vand.u32 %v57, 4294901760
    %v151 = vsub.f32 %v57, %v150
    %v152 = vand.u32 %v151, 4294901760
    %v153 = vsub.f32 %v151, %v152
    %v154 = vand.u32 %v153, 4294901760
    %155 = vmatpush1.msra.mxu0 %v154
    %156 = vmatprep.subr.mxu0 0.0
    %v157 = vand.u32 %v56, 4294901760
    %v158 = vsub.f32 %v56, %v157
    %v159 = vand.u32 %v158, 4294901760
    %v160 = vsub.f32 %v158, %v159
    %v161 = vand.u32 %v160, 4294901760
    %162 = vmatpush1.msra.mxu0 %v161
    %163 = vmatprep.subr.mxu0 0.0
    %v164 = vand.u32 %v55, 4294901760
    %v165 = vsub.f32 %v55, %v164
    %v166 = vand.u32 %v165, 4294901760
    %v167 = vsub.f32 %v165, %v166
    %v168 = vand.u32 %v167, 4294901760
    %169 = vmatpush1.msra.mxu0 %v168
    %170 = vmatprep.subr.mxu0 0.0
    %v171 = vand.u32 %v54, 4294901760
    %v172 = vsub.f32 %v54, %v171
    %v173 = vand.u32 %v172, 4294901760
    %v174 = vsub.f32 %v172, %v173
    %v175 = vand.u32 %v174, 4294901760
    %176 = vmatpush1.msra.mxu0 %v175
    %177 = vmatprep.subr.mxu0 0.0
    %v178 = vand.u32 %v53, 4294901760
    %v179 = vsub.f32 %v53, %v178
    %v180 = vand.u32 %v179, 4294901760
    %v181 = vsub.f32 %v179, %v180
    %v182 = vand.u32 %v181, 4294901760
    %183 = vmatpush1.msra.mxu0 %v182
    %184 = vmatprep.subr.mxu0 0.0
    %v185 = vand.u32 %v52, 4294901760
    %v186 = vsub.f32 %v52, %v185
    %v187 = vand.u32 %v186, 4294901760
    %v188 = vsub.f32 %v186, %v187
    %v189 = vand.u32 %v188, 4294901760
    %190 = vmatpush1.msra.mxu0 %v189
    %191 = vmatprep.subr.mxu0 0.0
    %v192 = vand.u32 %v51, 4294901760
    %v193 = vsub.f32 %v51, %v192
    %v194 = vand.u32 %v193, 4294901760
    %v195 = vsub.f32 %v193, %v194
    %v196 = vand.u32 %v195, 4294901760
    %197 = vmatpush1.msra.mxu0 %v196
    %198 = vmatprep.subr.mxu0 0.0
    %v199 = vand.u32 %v50, 4294901760
    %v200 = vsub.f32 %v50, %v199
    %v201 = vand.u32 %v200, 4294901760
    %v202 = vsub.f32 %v200, %v201
    %v203 = vand.u32 %v202, 4294901760
    %204 = vmatpush1.msra.mxu0 %v203
    %205 = vmatprep.subr.mxu0 0.0
    %v206 = vand.u32 %v49, 4294901760
    %v207 = vsub.f32 %v49, %v206
    %v208 = vand.u32 %v207, 4294901760
    %v209 = vsub.f32 %v207, %v208
    %v210 = vand.u32 %v209, 4294901760
    %211 = vmatpush1.msra.mxu0 %v210
    %212 = vmatprep.subr.mxu0 0.0
    %v213 = vand.u32 %v48, 4294901760
    %v214 = vsub.f32 %v48, %v213
    %v215 = vand.u32 %v214, 4294901760
    %v216 = vsub.f32 %v214, %v215
    %v217 = vand.u32 %v216, 4294901760
    %218 = vmatpush1.msra.mxu0 %v217
    %219 = vmatprep.subr.mxu0 0.0
    %v220 = vand.u32 %v47, 4294901760
    %v221 = vsub.f32 %v47, %v220
    %v222 = vand.u32 %v221, 4294901760
    %v223 = vsub.f32 %v221, %v222
    %v224 = vand.u32 %v223, 4294901760
    %225 = vmatpush1.msra.mxu0 %v224
    %226 = vmatprep.subr.mxu0 0.0
    %v227 = vand.u32 %v46, 4294901760
    %v228 = vsub.f32 %v46, %v227
    %v229 = vand.u32 %v228, 4294901760
    %v230 = vsub.f32 %v228, %v229
    %v231 = vand.u32 %v230, 4294901760
    %232 = vmatpush1.msra.mxu0 %v231
    %233 = vmatprep.subr.mxu0 0.0
    %v234 = vand.u32 %v45, 4294901760
    %v235 = vsub.f32 %v45, %v234
    %v236 = vand.u32 %v235, 4294901760
    %v237 = vsub.f32 %v235, %v236
    %v238 = vand.u32 %v237, 4294901760
    %239 = vmatpush1.msra.mxu0 %v238
    %240 = vmatprep.subr.mxu0 0.0
    %v241 = vand.u32 %v44, 4294901760
    %v242 = vsub.f32 %v44, %v241
    %v243 = vand.u32 %v242, 4294901760
    %v244 = vsub.f32 %v242, %v243
    %v245 = vand.u32 %v244, 4294901760
    %246 = vmatpush1.msra.mxu0 %v245
    %247 = vmatprep.subr.mxu0 0.0
    %v248 = vand.u32 %v43, 4294901760
    %v249 = vsub.f32 %v43, %v248
    %v250 = vand.u32 %v249, 4294901760
    %v251 = vsub.f32 %v249, %v250
    %v252 = vand.u32 %v251, 4294901760
    %253 = vmatpush1.msra.mxu0 %v252
    %254 = vmatprep.subr.mxu0 0.0
    %v255 = vand.u32 %v42, 4294901760
    %v256 = vsub.f32 %v42, %v255
    %v257 = vand.u32 %v256, 4294901760
    %v258 = vsub.f32 %v256, %v257
    %v259 = vand.u32 %v258, 4294901760
    %260 = vmatpush1.msra.mxu0 %v259
    %261 = vmatprep.subr.mxu0 0.0
    %262 = vmatpush2.msra.mxu0 0.0
    %263 = vmatprep.subr.mxu0 0.0
    %264 = vmatpush2.msra.mxu0 0.0
    %265 = vmatprep.subr.mxu0 0.0
    %266 = vmatpush2.msra.mxu0 0.0
    %267 = vmatprep.subr.mxu0 0.0
    %268 = vmatpush2.msra.mxu0 0.0
    %269 = vmatprep.subr.mxu0 0.0
    %270 = vmatpush2.msra.mxu0 0.0
    %271 = vmatprep.subr.mxu0 0.0
    %272 = vmatpush2.msra.mxu0 0.0
    %273 = vmatprep.subr.mxu0 0.0
    %274 = vmatpush2.msra.mxu0 0.0
    %275 = vmatprep.subr.mxu0 0.0
    %276 = vmatpush2.msra.mxu0 0.0
    %277 = vmatprep.subr.mxu0 0.0
    %278 = vmatpush2.msra.mxu0 0.0
    %279 = vmatprep.subr.mxu0 0.0
    %280 = vmatpush2.msra.mxu0 0.0
    %281 = vmatprep.subr.mxu0 0.0
    %282 = vmatpush2.msra.mxu0 0.0
    %283 = vmatprep.subr.mxu0 0.0
    %284 = vmatpush2.msra.mxu0 0.0
    %285 = vmatprep.subr.mxu0 0.0
    %286 = vmatpush2.msra.mxu0 0.0
    %287 = vmatprep.subr.mxu0 0.0
    %288 = vmatpush2.msra.mxu0 0.0
    %289 = vmatprep.subr.mxu0 0.0
    %290 = vmatpush2.msra.mxu0 0.0
    %291 = vmatprep.subr.mxu0 0.0
    %292 = vmatpush2.msra.mxu0 0.0
    %293 = vmatprep.mubr.f32.mxu0 0.0
    %v294 = vand.u32 %v41, 4294901760
    %295 = vmatmul.mubr.f32.gmra.mxu0 %v294
    %v296 = vpop.f32.mrf.mxu0
    %v297 = vadd.f32 %v146, %v296
    %v298 = vpop.f32.mrf.mxu0
    %299 = vdwg.mxu0
    %300 = vmatprep.subr.mxu0 0.0
    %v301 = vand.u32 %v57, 4294901760
    %v302 = vsub.f32 %v57, %v301
    %303 = vmatpush1.msra.mxu0 %v302
    %304 = vmatprep.subr.mxu0 0.0
    %v305 = vand.u32 %v56, 4294901760
    %v306 = vsub.f32 %v56, %v305
    %307 = vmatpush1.msra.mxu0 %v306
    %308 = vmatprep.subr.mxu0 0.0
    %v309 = vand.u32 %v55, 4294901760
    %v310 = vsub.f32 %v55, %v309
    %311 = vmatpush1.msra.mxu0 %v310
    %312 = vmatprep.subr.mxu0 0.0
    %v313 = vand.u32 %v54, 4294901760
    %v314 = vsub.f32 %v54, %v313
    %315 = vmatpush1.msra.mxu0 %v314
    %316 = vmatprep.subr.mxu0 0.0
    %v317 = vand.u32 %v53, 4294901760
    %v318 = vsub.f32 %v53, %v317
    %319 = vmatpush1.msra.mxu0 %v318
    %320 = vmatprep.subr.mxu0 0.0
    %v321 = vand.u32 %v52, 4294901760
    %v322 = vsub.f32 %v52, %v321
    %323 = vmatpush1.msra.mxu0 %v322
    %324 = vmatprep.subr.mxu0 0.0
    %v325 = vand.u32 %v51, 4294901760
    %v326 = vsub.f32 %v51, %v325
    %327 = vmatpush1.msra.mxu0 %v326
    %328 = vmatprep.subr.mxu0 0.0
    %v329 = vand.u32 %v50, 4294901760
    %v330 = vsub.f32 %v50, %v329
    %331 = vmatpush1.msra.mxu0 %v330
    %332 = vmatprep.subr.mxu0 0.0
    %v333 = vand.u32 %v49, 4294901760
    %v334 = vsub.f32 %v49, %v333
    %335 = vmatpush1.msra.mxu0 %v334
    %336 = vmatprep.subr.mxu0 0.0
    %v337 = vand.u32 %v48, 4294901760
    %v338 = vsub.f32 %v48, %v337
    %339 = vmatpush1.msra.mxu0 %v338
    %340 = vmatprep.subr.mxu0 0.0
    %v341 = vand.u32 %v47, 4294901760
    %v342 = vsub.f32 %v47, %v341
    %343 = vmatpush1.msra.mxu0 %v342
    %344 = vmatprep.subr.mxu0 0.0
    %v345 = vand.u32 %v46, 4294901760
    %v346 = vsub.f32 %v46, %v345
    %347 = vmatpush1.msra.mxu0 %v346
    %348 = vmatprep.subr.mxu0 0.0
    %v349 = vand.u32 %v45, 4294901760
    %v350 = vsub.f32 %v45, %v349
    %351 = vmatpush1.msra.mxu0 %v350
    %352 = vmatprep.subr.mxu0 0.0
    %v353 = vand.u32 %v44, 4294901760
    %v354 = vsub.f32 %v44, %v353
    %355 = vmatpush1.msra.mxu0 %v354
    %356 = vmatprep.subr.mxu0 0.0
    %v357 = vand.u32 %v43, 4294901760
    %v358 = vsub.f32 %v43, %v357
    %359 = vmatpush1.msra.mxu0 %v358
    %360 = vmatprep.subr.mxu0 0.0
    %v361 = vand.u32 %v42, 4294901760
    %v362 = vsub.f32 %v42, %v361
    %363 = vmatpush1.msra.mxu0 %v362
    %364 = vmatprep.subr.mxu0 0.0
    %365 = vmatpush2.msra.mxu0 0.0
    %366 = vmatprep.subr.mxu0 0.0
    %367 = vmatpush2.msra.mxu0 0.0
    %368 = vmatprep.subr.mxu0 0.0
    %369 = vmatpush2.msra.mxu0 0.0
    %370 = vmatprep.subr.mxu0 0.0
    %371 = vmatpush2.msra.mxu0 0.0
    %372 = vmatprep.subr.mxu0 0.0
    %373 = vmatpush2.msra.mxu0 0.0
    %374 = vmatprep.subr.mxu0 0.0
    %375 = vmatpush2.msra.mxu0 0.0
    %376 = vmatprep.subr.mxu0 0.0
    %377 = vmatpush2.msra.mxu0 0.0
    %378 = vmatprep.subr.mxu0 0.0
    %379 = vmatpush2.msra.mxu0 0.0
    %380 = vmatprep.subr.mxu0 0.0
    %381 = vmatpush2.msra.mxu0 0.0
    %382 = vmatprep.subr.mxu0 0.0
    %383 = vmatpush2.msra.mxu0 0.0
    %384 = vmatprep.subr.mxu0 0.0
    %385 = vmatpush2.msra.mxu0 0.0
    %386 = vmatprep.subr.mxu0 0.0
    %387 = vmatpush2.msra.mxu0 0.0
    %388 = vmatprep.subr.mxu0 0.0
    %389 = vmatpush2.msra.mxu0 0.0
    %390 = vmatprep.subr.mxu0 0.0
    %391 = vmatpush2.msra.mxu0 0.0
    %392 = vmatprep.subr.mxu0 0.0
    %393 = vmatpush2.msra.mxu0 0.0
    %394 = vmatprep.subr.mxu0 0.0
    %395 = vmatpush2.msra.mxu0 0.0
    %396 = vmatprep.mubr.f32.mxu0 0.0
    %v397 = vand.u32 %v41, 4294901760
    %v398 = vsub.f32 %v41, %v397
    %399 = vmatmul.mubr.f32.gmra.mxu0 %v398
    %v400 = vpop.f32.mrf.mxu0
    %v401 = vadd.f32 %v297, %v400
    %v402 = vpop.f32.mrf.mxu0
    %403 = vdwg.mxu0
    %404 = vmatprep.subr.mxu0 0.0
    %v405 = vand.u32 %v57, 4294901760
    %406 = vmatpush1.msra.mxu0 %v405
    %407 = vmatprep.subr.mxu0 0.0
    %v408 = vand.u32 %v56, 4294901760
    %409 = vmatpush1.msra.mxu0 %v408
    %410 = vmatprep.subr.mxu0 0.0
    %v411 = vand.u32 %v55, 4294901760
    %412 = vmatpush1.msra.mxu0 %v411
    %413 = vmatprep.subr.mxu0 0.0
    %v414 = vand.u32 %v54, 4294901760
    %415 = vmatpush1.msra.mxu0 %v414
    %416 = vmatprep.subr.mxu0 0.0
    %v417 = vand.u32 %v53, 4294901760
    %418 = vmatpush1.msra.mxu0 %v417
    %419 = vmatprep.subr.mxu0 0.0
    %v420 = vand.u32 %v52, 4294901760
    %421 = vmatpush1.msra.mxu0 %v420
    %422 = vmatprep.subr.mxu0 0.0
    %v423 = vand.u32 %v51, 4294901760
    %424 = vmatpush1.msra.mxu0 %v423
    %425 = vmatprep.subr.mxu0 0.0
    %v426 = vand.u32 %v50, 4294901760
    %427 = vmatpush1.msra.mxu0 %v426
    %428 = vmatprep.subr.mxu0 0.0
    %v429 = vand.u32 %v49, 4294901760
    %430 = vmatpush1.msra.mxu0 %v429
    %431 = vmatprep.subr.mxu0 0.0
    %v432 = vand.u32 %v48, 4294901760
    %433 = vmatpush1.msra.mxu0 %v432
    %434 = vmatprep.subr.mxu0 0.0
    %v435 = vand.u32 %v47, 4294901760
    %436 = vmatpush1.msra.mxu0 %v435
    %437 = vmatprep.subr.mxu0 0.0
    %v438 = vand.u32 %v46, 4294901760
    %439 = vmatpush1.msra.mxu0 %v438
    %440 = vmatprep.subr.mxu0 0.0
    %v441 = vand.u32 %v45, 4294901760
    %442 = vmatpush1.msra.mxu0 %v441
    %443 = vmatprep.subr.mxu0 0.0
    %v444 = vand.u32 %v44, 4294901760
    %445 = vmatpush1.msra.mxu0 %v444
    %446 = vmatprep.subr.mxu0 0.0
    %v447 = vand.u32 %v43, 4294901760
    %448 = vmatpush1.msra.mxu0 %v447
    %449 = vmatprep.subr.mxu0 0.0
    %v450 = vand.u32 %v42, 4294901760
    %451 = vmatpush1.msra.mxu0 %v450
    %452 = vmatprep.subr.mxu0 0.0
    %453 = vmatpush2.msra.mxu0 0.0
    %454 = vmatprep.subr.mxu0 0.0
    %455 = vmatpush2.msra.mxu0 0.0
    %456 = vmatprep.subr.mxu0 0.0
    %457 = vmatpush2.msra.mxu0 0.0
    %458 = vmatprep.subr.mxu0 0.0
    %459 = vmatpush2.msra.mxu0 0.0
    %460 = vmatprep.subr.mxu0 0.0
    %461 = vmatpush2.msra.mxu0 0.0
    %462 = vmatprep.subr.mxu0 0.0
    %463 = vmatpush2.msra.mxu0 0.0
    %464 = vmatprep.subr.mxu0 0.0
    %465 = vmatpush2.msra.mxu0 0.0
    %466 = vmatprep.subr.mxu0 0.0
    %467 = vmatpush2.msra.mxu0 0.0
    %468 = vmatprep.subr.mxu0 0.0
    %469 = vmatpush2.msra.mxu0 0.0
    %470 = vmatprep.subr.mxu0 0.0
    %471 = vmatpush2.msra.mxu0 0.0
    %472 = vmatprep.subr.mxu0 0.0
    %473 = vmatpush2.msra.mxu0 0.0
    %474 = vmatprep.subr.mxu0 0.0
    %475 = vmatpush2.msra.mxu0 0.0
    %476 = vmatprep.subr.mxu0 0.0
    %477 = vmatpush2.msra.mxu0 0.0
    %478 = vmatprep.subr.mxu0 0.0
    %479 = vmatpush2.msra.mxu0 0.0
    %480 = vmatprep.subr.mxu0 0.0
    %481 = vmatpush2.msra.mxu0 0.0
    %482 = vmatprep.subr.mxu0 0.0
    %483 = vmatpush2.msra.mxu0 0.0
    %484 = vmatprep.mubr.f32.mxu0 0.0
    %v485 = vand.u32 %v41, 4294901760
    %v486 = vsub.f32 %v41, %v485
    %v487 = vand.u32 %v486, 4294901760
    %488 = vmatmul.mubr.f32.gmra.mxu0 %v487
    %v489 = vpop.f32.mrf.mxu0
    %v490 = vadd.f32 %v401, %v489
    %v491 = vpop.f32.mrf.mxu0
    %492 = vdwg.mxu0
    %493 = vmatprep.subr.mxu0 0.0
    %v494 = vand.u32 %v57, 4294901760
    %v495 = vsub.f32 %v57, %v494
    %v496 = vand.u32 %v495, 4294901760
    %497 = vmatpush1.msra.mxu0 %v496
    %498 = vmatprep.subr.mxu0 0.0
    %v499 = vand.u32 %v56, 4294901760
    %v500 = vsub.f32 %v56, %v499
    %v501 = vand.u32 %v500, 4294901760
    %502 = vmatpush1.msra.mxu0 %v501
    %503 = vmatprep.subr.mxu0 0.0
    %v504 = vand.u32 %v55, 4294901760
    %v505 = vsub.f32 %v55, %v504
    %v506 = vand.u32 %v505, 4294901760
    %507 = vmatpush1.msra.mxu0 %v506
    %508 = vmatprep.subr.mxu0 0.0
    %v509 = vand.u32 %v54, 4294901760
    %v510 = vsub.f32 %v54, %v509
    %v511 = vand.u32 %v510, 4294901760
    %512 = vmatpush1.msra.mxu0 %v511
    %513 = vmatprep.subr.mxu0 0.0
    %v514 = vand.u32 %v53, 4294901760
    %v515 = vsub.f32 %v53, %v514
    %v516 = vand.u32 %v515, 4294901760
    %517 = vmatpush1.msra.mxu0 %v516
    %518 = vmatprep.subr.mxu0 0.0
    %v519 = vand.u32 %v52, 4294901760
    %v520 = vsub.f32 %v52, %v519
    %v521 = vand.u32 %v520, 4294901760
    %522 = vmatpush1.msra.mxu0 %v521
    %523 = vmatprep.subr.mxu0 0.0
    %v524 = vand.u32 %v51, 4294901760
    %v525 = vsub.f32 %v51, %v524
    %v526 = vand.u32 %v525, 4294901760
    %527 = vmatpush1.msra.mxu0 %v526
    %528 = vmatprep.subr.mxu0 0.0
    %v529 = vand.u32 %v50, 4294901760
    %v530 = vsub.f32 %v50, %v529
    %v531 = vand.u32 %v530, 4294901760
    %532 = vmatpush1.msra.mxu0 %v531
    %533 = vmatprep.subr.mxu0 0.0
    %v534 = vand.u32 %v49, 4294901760
    %v535 = vsub.f32 %v49, %v534
    %v536 = vand.u32 %v535, 4294901760
    %537 = vmatpush1.msra.mxu0 %v536
    %538 = vmatprep.subr.mxu0 0.0
    %v539 = vand.u32 %v48, 4294901760
    %v540 = vsub.f32 %v48, %v539
    %v541 = vand.u32 %v540, 4294901760
    %542 = vmatpush1.msra.mxu0 %v541
    %543 = vmatprep.subr.mxu0 0.0
    %v544 = vand.u32 %v47, 4294901760
    %v545 = vsub.f32 %v47, %v544
    %v546 = vand.u32 %v545, 4294901760
    %547 = vmatpush1.msra.mxu0 %v546
    %548 = vmatprep.subr.mxu0 0.0
    %v549 = vand.u32 %v46, 4294901760
    %v550 = vsub.f32 %v46, %v549
    %v551 = vand.u32 %v550, 4294901760
    %552 = vmatpush1.msra.mxu0 %v551
    %553 = vmatprep.subr.mxu0 0.0
    %v554 = vand.u32 %v45, 4294901760
    %v555 = vsub.f32 %v45, %v554
    %v556 = vand.u32 %v555, 4294901760
    %557 = vmatpush1.msra.mxu0 %v556
    %558 = vmatprep.subr.mxu0 0.0
    %v559 = vand.u32 %v44, 4294901760
    %v560 = vsub.f32 %v44, %v559
    %v561 = vand.u32 %v560, 4294901760
    %562 = vmatpush1.msra.mxu0 %v561
    %563 = vmatprep.subr.mxu0 0.0
    %v564 = vand.u32 %v43, 4294901760
    %v565 = vsub.f32 %v43, %v564
    %v566 = vand.u32 %v565, 4294901760
    %567 = vmatpush1.msra.mxu0 %v566
    %568 = vmatprep.subr.mxu0 0.0
    %v569 = vand.u32 %v42, 4294901760
    %v570 = vsub.f32 %v42, %v569
    %v571 = vand.u32 %v570, 4294901760
    %572 = vmatpush1.msra.mxu0 %v571
    %573 = vmatprep.subr.mxu0 0.0
    %574 = vmatpush2.msra.mxu0 0.0
    %575 = vmatprep.subr.mxu0 0.0
    %576 = vmatpush2.msra.mxu0 0.0
    %577 = vmatprep.subr.mxu0 0.0
    %578 = vmatpush2.msra.mxu0 0.0
    %579 = vmatprep.subr.mxu0 0.0
    %580 = vmatpush2.msra.mxu0 0.0
    %581 = vmatprep.subr.mxu0 0.0
    %582 = vmatpush2.msra.mxu0 0.0
    %583 = vmatprep.subr.mxu0 0.0
    %584 = vmatpush2.msra.mxu0 0.0
    %585 = vmatprep.subr.mxu0 0.0
    %586 = vmatpush2.msra.mxu0 0.0
    %587 = vmatprep.subr.mxu0 0.0
    %588 = vmatpush2.msra.mxu0 0.0
    %589 = vmatprep.subr.mxu0 0.0
    %590 = vmatpush2.msra.mxu0 0.0
    %591 = vmatprep.subr.mxu0 0.0
    %592 = vmatpush2.msra.mxu0 0.0
    %593 = vmatprep.subr.mxu0 0.0
    %594 = vmatpush2.msra.mxu0 0.0
    %595 = vmatprep.subr.mxu0 0.0
    %596 = vmatpush2.msra.mxu0 0.0
    %597 = vmatprep.subr.mxu0 0.0
    %598 = vmatpush2.msra.mxu0 0.0
    %599 = vmatprep.subr.mxu0 0.0
    %600 = vmatpush2.msra.mxu0 0.0
    %601 = vmatprep.subr.mxu0 0.0
    %602 = vmatpush2.msra.mxu0 0.0
    %603 = vmatprep.subr.mxu0 0.0
    %604 = vmatpush2.msra.mxu0 0.0
    %605 = vmatprep.mubr.f32.mxu0 0.0
    %v606 = vand.u32 %v41, 4294901760
    %607 = vmatmul.mubr.f32.gmra.mxu0 %v606
    %v608 = vpop.f32.mrf.mxu0
    %v609 = vadd.f32 %v490, %v608
    %v610 = vpop.f32.mrf.mxu0
    %611 = vdwg.mxu0
    %612 = vmatprep.subr.mxu0 0.0
    %v613 = vand.u32 %v57, 4294901760
    %614 = vmatpush1.msra.mxu0 %v613
    %615 = vmatprep.subr.mxu0 0.0
    %v616 = vand.u32 %v56, 4294901760
    %617 = vmatpush1.msra.mxu0 %v616
    %618 = vmatprep.subr.mxu0 0.0
    %v619 = vand.u32 %v55, 4294901760
    %620 = vmatpush1.msra.mxu0 %v619
    %621 = vmatprep.subr.mxu0 0.0
    %v622 = vand.u32 %v54, 4294901760
    %623 = vmatpush1.msra.mxu0 %v622
    %624 = vmatprep.subr.mxu0 0.0
    %v625 = vand.u32 %v53, 4294901760
    %626 = vmatpush1.msra.mxu0 %v625
    %627 = vmatprep.subr.mxu0 0.0
    %v628 = vand.u32 %v52, 4294901760
    %629 = vmatpush1.msra.mxu0 %v628
    %630 = vmatprep.subr.mxu0 0.0
    %v631 = vand.u32 %v51, 4294901760
    %632 = vmatpush1.msra.mxu0 %v631
    %633 = vmatprep.subr.mxu0 0.0
    %v634 = vand.u32 %v50, 4294901760
    %635 = vmatpush1.msra.mxu0 %v634
    %636 = vmatprep.subr.mxu0 0.0
    %v637 = vand.u32 %v49, 4294901760
    %638 = vmatpush1.msra.mxu0 %v637
    %639 = vmatprep.subr.mxu0 0.0
    %v640 = vand.u32 %v48, 4294901760
    %641 = vmatpush1.msra.mxu0 %v640
    %642 = vmatprep.subr.mxu0 0.0
    %v643 = vand.u32 %v47, 4294901760
    %644 = vmatpush1.msra.mxu0 %v643
    %645 = vmatprep.subr.mxu0 0.0
    %v646 = vand.u32 %v46, 4294901760
    %647 = vmatpush1.msra.mxu0 %v646
    %648 = vmatprep.subr.mxu0 0.0
    %v649 = vand.u32 %v45, 4294901760
    %650 = vmatpush1.msra.mxu0 %v649
    %651 = vmatprep.subr.mxu0 0.0
    %v652 = vand.u32 %v44, 4294901760
    %653 = vmatpush1.msra.mxu0 %v652
    %654 = vmatprep.subr.mxu0 0.0
    %v655 = vand.u32 %v43, 4294901760
    %656 = vmatpush1.msra.mxu0 %v655
    %657 = vmatprep.subr.mxu0 0.0
    %v658 = vand.u32 %v42, 4294901760
    %659 = vmatpush1.msra.mxu0 %v658
    %660 = vmatprep.subr.mxu0 0.0
    %661 = vmatpush2.msra.mxu0 0.0
    %662 = vmatprep.subr.mxu0 0.0
    %663 = vmatpush2.msra.mxu0 0.0
    %664 = vmatprep.subr.mxu0 0.0
    %665 = vmatpush2.msra.mxu0 0.0
    %666 = vmatprep.subr.mxu0 0.0
    %667 = vmatpush2.msra.mxu0 0.0
    %668 = vmatprep.subr.mxu0 0.0
    %669 = vmatpush2.msra.mxu0 0.0
    %670 = vmatprep.subr.mxu0 0.0
    %671 = vmatpush2.msra.mxu0 0.0
    %672 = vmatprep.subr.mxu0 0.0
    %673 = vmatpush2.msra.mxu0 0.0
    %674 = vmatprep.subr.mxu0 0.0
    %675 = vmatpush2.msra.mxu0 0.0
    %676 = vmatprep.subr.mxu0 0.0
    %677 = vmatpush2.msra.mxu0 0.0
    %678 = vmatprep.subr.mxu0 0.0
    %679 = vmatpush2.msra.mxu0 0.0
    %680 = vmatprep.subr.mxu0 0.0
    %681 = vmatpush2.msra.mxu0 0.0
    %682 = vmatprep.subr.mxu0 0.0
    %683 = vmatpush2.msra.mxu0 0.0
    %684 = vmatprep.subr.mxu0 0.0
    %685 = vmatpush2.msra.mxu0 0.0
    %686 = vmatprep.subr.mxu0 0.0
    %687 = vmatpush2.msra.mxu0 0.0
    %688 = vmatprep.subr.mxu0 0.0
    %689 = vmatpush2.msra.mxu0 0.0
    %690 = vmatprep.subr.mxu0 0.0
    %691 = vmatpush2.msra.mxu0 0.0
    %692 = vmatprep.mubr.f32.mxu0 0.0
    %v693 = vand.u32 %v41, 4294901760
    %694 = vmatmul.mubr.f32.gmra.mxu0 %v693
    %v695 = vpop.f32.mrf.mxu0
    %v696 = vadd.f32 %v609, %v695
    %v697 = vpop.f32.mrf.mxu0
    %698 = vdwg.mxu0
    %v699 = vmul.f32 %v696, 0.03125
    %v700 = vadd.f32 %v699, 1e-12
    %v701 = vrsqrt.pop %v700
    %v702 = vmul.f32 %v40, %v701
    %703 = vst [vmem:[#allocation7] sm:$0xff] %v702
    // Predicated region
    $region18: #{tpu_custom_call.1} parent=1 // pred_check
      _
    $region19: #{tpu_custom_call.1} parent=1 // pred_check_branch
      %705 = sbr.rel (0) target = $region21
    $region20: #{tpu_custom_call.1} parent=1 // pred_region
      %s707 = ssub.s32 128, 64
      %708 = vsyncadd [#allocation4], %s707
      %s709 = sshll.u32 [#allocation7], 4
      %s710 = int_to_ptr.vmem [resolvable:$true] %s709
      %715 = dma.vmem_to_hbm [thread:$0]  %s710, 64, %s2, [#allocation4], 64, 64, 4
    $region21: #{tpu_custom_call.1} parent=1 // pred_fallthru
      _
    // Predicated region
    $region22: #{tpu_custom_call.1} parent=1 // pred_check
      _
    $region23: #{tpu_custom_call.1} parent=1 // pred_check_branch
      %717 = sbr.rel (0) target = $region25
    $region24: #{tpu_custom_call.1} parent=1 // pred_region
      %718 = dma.done [#allocation4], 128
    $region25: #{tpu_custom_call.1} parent=1 // pred_fallthru
      _
    %719 = vsyncpa [#allocation3], 1
    %720 = vsyncpa [#allocation6], 1
    %721 = vsyncpa [#allocation4], 1

</llo_original>
